<compile_context>
chip_gen: v7x
topology: tpu7x:2x2x1
jax: 0.10.0
libtpu: 0.0.40
codegen_flags: <defaults>
</compile_context>

<pallas_src>
import jax
import jax.numpy as jnp
from jax import lax
from jax.experimental import pallas as pl
from jax.experimental.pallas import tpu as pltpu


# ---------------------------------------------------------------------------
# Pass 1: per-sample global sum / sum-of-squares accumulated across T tiles.
# ---------------------------------------------------------------------------
def _stats_kernel(x_ref, sum_ref, ssq_ref):
    t = pl.program_id(1)

    @pl.when(t == 0)
    def _init():
        sum_ref[...] = jnp.zeros_like(sum_ref)
        ssq_ref[...] = jnp.zeros_like(ssq_ref)

    x = x_ref[...].astype(jnp.float32)          # (1, C, T_tile), read once
    # Fused: one traversal produces both sum and sum-of-squares.
    sum_ref[...] += jnp.sum(x)
    ssq_ref[...] += jnp.sum(x * x)


# ---------------------------------------------------------------------------
# Pass 2: elementwise normalize with pre-folded per-channel scale / shift.
# ---------------------------------------------------------------------------
def _normalize_kernel(x_ref, scale_ref, shift_ref, o_ref):
    x = x_ref[...].astype(jnp.float32)          # (1, C, T_tile)
    # y = x * scale + shift   (scale/shift are (1, C, 1), broadcast over lanes)
    y = x * scale_ref[...] + shift_ref[...]
    o_ref[...] = y.astype(o_ref.dtype)


def _choose_t_tile(t_pad, c, itemsize, max_tile_bytes=2 * 1024 * 1024):
    """Largest T tile that (a) is a multiple of 128, (b) divides t_pad,
    (c) keeps C * T_tile * itemsize under the byte cap."""
    k = t_pad // 128
    max_units = max(1, min(k, max_tile_bytes // max(1, 128 * c * itemsize)))
    best = 1
    for d in range(1, k + 1):
        if k % d == 0 and d <= max_units:
            best = d
    return best * 128


def global_channel_layer_norm(x, gamma, beta, eps=1e-5):
    """x: (N, C, T); gamma, beta: (C, 1). Returns (N, C, T) in x.dtype."""
    N, C, T = x.shape
    itemsize = jnp.dtype(x.dtype).itemsize

    # Lane-dense blocks: pad T up to a multiple of 128. Zero padding contributes
    # 0 to both sum and sum-of-squares, so stats stay exact (count uses true T).
    T_pad = ((T + 127) // 128) * 128
    x_p = jnp.pad(x, ((0, 0), (0, 0), (0, T_pad - T))) if T_pad != T else x

    t_tile = _choose_t_tile(T_pad, C, itemsize)
    n_t = T_pad // t_tile
    tile_bytes = C * t_tile * itemsize
    # in(2-deep) + out(2-deep) tiles + scale/shift + headroom; capped for v7x.
    vmem_limit = int(min(40 * 2**20, max(16 * 2**20, 8 * tile_bytes)))

    # ---------------- pass 1: global sum / sumsq per sample ----------------
    sums, ssqs = pl.pallas_call(
        _stats_kernel,
        out_shape=(
            jax.ShapeDtypeStruct((N, 1, 1), jnp.float32),
            jax.ShapeDtypeStruct((N, 1, 1), jnp.float32),
        ),
        grid=(N, n_t),
        in_specs=[pl.BlockSpec((1, C, t_tile), lambda n, t: (n, 0, t))],
        out_specs=(
            pl.BlockSpec((1, 1, 1), lambda n, t: (n, 0, 0)),
            pl.BlockSpec((1, 1, 1), lambda n, t: (n, 0, 0)),
        ),
        compiler_params=pltpu.CompilerParams(
            dimension_semantics=("parallel", "arbitrary"),
            vmem_limit_bytes=vmem_limit,
        ),
        cost_estimate=pl.CostEstimate(
            flops=3 * N * C * T_pad,
            transcendentals=0,
            bytes_accessed=N * C * T_pad * itemsize,
        ),
    )(x_p)

    # ------------- tiny per-sample fold of stats + affine params -----------
    count = jnp.float32(C * T)                       # true element count
    mean = sums[:, 0, 0] / count                     # (N,)
    ex2 = ssqs[:, 0, 0] / count
    var = jnp.maximum(ex2 - mean * mean, 0.0)        # biased var, f32 accumulation
    inv_std = lax.rsqrt(var + jnp.float32(eps))
    g = gamma.astype(jnp.float32).reshape(1, C, 1)
    b = beta.astype(jnp.float32).reshape(1, C, 1)
    scale = g * inv_std.reshape(N, 1, 1)             # (N, C, 1)
    shift = b - mean.reshape(N, 1, 1) * scale        # (N, C, 1)

    # ---------------- pass 2: normalize (fully parallel) -------------------
    out_p = pl.pallas_call(
        _normalize_kernel,
        out_shape=jax.ShapeDtypeStruct((N, C, T_pad), x.dtype),
        grid=(N, n_t),
        in_specs=[
            pl.BlockSpec((1, C, t_tile), lambda n, t: (n, 0, t)),
            pl.BlockSpec((1, C, 1), lambda n, t: (n, 0, 0)),
            pl.BlockSpec((1, C, 1), lambda n, t: (n, 0, 0)),
        ],
        out_specs=pl.BlockSpec((1, C, t_tile), lambda n, t: (n, 0, t)),
        compiler_params=pltpu.CompilerParams(
            dimension_semantics=("parallel", "parallel"),
            vmem_limit_bytes=vmem_limit,
        ),
        cost_estimate=pl.CostEstimate(
            flops=2 * N * C * T_pad,
            transcendentals=0,
            bytes_accessed=2 * N * C * T_pad * itemsize,
        ),
    )(x_p, scale, shift)

    return out_p[:, :, :T] if T_pad != T else out_p


def reference_gcln(x, gamma, beta, eps=1e-5):
    mean = jnp.mean(x, axis=(1, 2), keepdims=True)
    var = jnp.mean((x - mean) ** 2, axis=(1, 2), keepdims=True)
    return gamma * (x - mean) / jnp.sqrt(var + eps) + beta


if __name__ == "__main__":
    key = jax.random.PRNGKey(0)
    N, C, T = 2, 4, 16
    x = jax.random.normal(key, (N, C, T), dtype=jnp.float32)

    # Deterministic parameter init matching nn.Module.__init__:
    # beta = zeros(dim, 1), gamma = ones(dim, 1)
    gamma = jnp.ones((C, 1), dtype=jnp.float32)
    beta = jnp.zeros((C, 1), dtype=jnp.float32)

    out = global_channel_layer_norm(x, gamma, beta, eps=1e-5)
    out = jax.block_until_ready(out)

    ref = reference_gcln(x, gamma, beta, eps=1e-5)
    assert out.shape == (N, C, T)
    assert jnp.allclose(out, ref, atol=1e-5, rtol=1e-5), "mismatch vs reference"

    print("KERNEL_OK")
</pallas_src>

<mosaic_0001>
module attributes {stable_mosaic.version = 11 : i64} {
  func.func @_stats_kernel(%arg0: i32, %arg1: i32, %arg2: memref<1x4x128xf32, #tpu.memory_space<vmem>>, %arg3: memref<1x1x1xf32, #tpu.memory_space<vmem>>, %arg4: memref<1x1x1xf32, #tpu.memory_space<vmem>>) attributes {dimension_semantics = [#tpu.dimension_semantics<parallel>, #tpu.dimension_semantics<arbitrary>], iteration_bounds = array<i64: 2, 1>, scalar_prefetch = 0 : i64, scratch_operands = 0 : i64, tpu.core_type = #tpu.core_type<tc>, window_params = [{transform_indices = @transform_0, window_bounds = array<i64: 1, 4, 128>}, {transform_indices = @transform_1, window_bounds = array<i64: 1, 1, 1>}, {transform_indices = @transform_2, window_bounds = array<i64: 1, 1, 1>}]} {
    %c0_i32 = arith.constant 0 : i32
    %0 = arith.cmpi eq, %arg1, %c0_i32 : i32
    %1 = arith.extui %0 : i1 to i32
    %c0_i32_0 = arith.constant 0 : i32
    %2 = arith.cmpi ne, %1, %c0_i32_0 : i32
    scf.if %2 {
      %cst_16 = arith.constant 0.000000e+00 : f32
      %21 = vector.broadcast %cst_16 : f32 to vector<1x1x1xf32>
      %c0_17 = arith.constant 0 : index
      %c0_18 = arith.constant 0 : index
      %c0_19 = arith.constant 0 : index
      %22 = vector.load %arg3[%c0_17, %c0_18, %c0_19] : memref<1x1x1xf32, #tpu.memory_space<vmem>>, vector<1x1x1xf32>
      tpu.vector_store %arg3[%c0_17, %c0_18, %c0_19], %21 {strides = array<i32>} : memref<1x1x1xf32, #tpu.memory_space<vmem>>, vector<1x1x1xf32>,
      %cst_20 = arith.constant 0.000000e+00 : f32
      %23 = vector.broadcast %cst_20 : f32 to vector<1x1x1xf32>
      %c0_21 = arith.constant 0 : index
      %c0_22 = arith.constant 0 : index
      %c0_23 = arith.constant 0 : index
      %24 = vector.load %arg4[%c0_21, %c0_22, %c0_23] : memref<1x1x1xf32, #tpu.memory_space<vmem>>, vector<1x1x1xf32>
      tpu.vector_store %arg4[%c0_21, %c0_22, %c0_23], %23 {strides = array<i32>} : memref<1x1x1xf32, #tpu.memory_space<vmem>>, vector<1x1x1xf32>,
    } else {
    }
    %c0 = arith.constant 0 : index
    %c0_1 = arith.constant 0 : index
    %c0_2 = arith.constant 0 : index
    %3 = vector.load %arg2[%c0, %c0_1, %c0_2] : memref<1x4x128xf32, #tpu.memory_space<vmem>>, vector<1x4x128xf32>
    %c0_3 = arith.constant 0 : index
    %c0_4 = arith.constant 0 : index
    %c0_5 = arith.constant 0 : index
    %4 = vector.load %arg3[%c0_3, %c0_4, %c0_5] : memref<1x1x1xf32, #tpu.memory_space<vmem>>, vector<1x1x1xf32>
    %5 = vector.shape_cast %3 : vector<1x4x128xf32> to vector<1x1x4x128xf32>
    %cst = arith.constant dense<0.000000e+00> : vector<1xf32>
    %6 = vector.multi_reduction <add>, %5, %cst [1, 2, 3] : vector<1x1x4x128xf32> to vector<1xf32>
    %7 = vector.shape_cast %6 : vector<1xf32> to vector<1x1x1x1xf32>
    %8 = vector.extract %7[0, 0, 0, 0] : f32 from vector<1x1x1x1xf32>
    %9 = vector.broadcast %8 : f32 to vector<1x1x1xf32>
    %10 = arith.addf %4, %9 : vector<1x1x1xf32>
    %c0_6 = arith.constant 0 : index
    %c0_7 = arith.constant 0 : index
    %c0_8 = arith.constant 0 : index
    %11 = vector.load %arg3[%c0_6, %c0_7, %c0_8] : memref<1x1x1xf32, #tpu.memory_space<vmem>>, vector<1x1x1xf32>
    tpu.vector_store %arg3[%c0_6, %c0_7, %c0_8], %10 {strides = array<i32>} : memref<1x1x1xf32, #tpu.memory_space<vmem>>, vector<1x1x1xf32>,
    %c0_9 = arith.constant 0 : index
    %c0_10 = arith.constant 0 : index
    %c0_11 = arith.constant 0 : index
    %12 = vector.load %arg4[%c0_9, %c0_10, %c0_11] : memref<1x1x1xf32, #tpu.memory_space<vmem>>, vector<1x1x1xf32>
    %13 = arith.mulf %3, %3 : vector<1x4x128xf32>
    %14 = vector.shape_cast %13 : vector<1x4x128xf32> to vector<1x1x4x128xf32>
    %cst_12 = arith.constant dense<0.000000e+00> : vector<1xf32>
    %15 = vector.multi_reduction <add>, %14, %cst_12 [1, 2, 3] : vector<1x1x4x128xf32> to vector<1xf32>
    %16 = vector.shape_cast %15 : vector<1xf32> to vector<1x1x1x1xf32>
    %17 = vector.extract %16[0, 0, 0, 0] : f32 from vector<1x1x1x1xf32>
    %18 = vector.broadcast %17 : f32 to vector<1x1x1xf32>
    %19 = arith.addf %12, %18 : vector<1x1x1xf32>
    %c0_13 = arith.constant 0 : index
    %c0_14 = arith.constant 0 : index
    %c0_15 = arith.constant 0 : index
    %20 = vector.load %arg4[%c0_13, %c0_14, %c0_15] : memref<1x1x1xf32, #tpu.memory_space<vmem>>, vector<1x1x1xf32>
    tpu.vector_store %arg4[%c0_13, %c0_14, %c0_15], %19 {strides = array<i32>} : memref<1x1x1xf32, #tpu.memory_space<vmem>>, vector<1x1x1xf32>,
    return
  }
  func.func @transform_0(%arg0: i32, %arg1: i32) -> (i32, i32, i32) {
    %c0_i32 = arith.constant 0 : i32
    %c0_i32_0 = arith.constant 0 : i32
    return %arg0, %c0_i32, %arg1 : i32, i32, i32
  }
  func.func @transform_1(%arg0: i32, %arg1: i32) -> (i32, i32, i32) {
    %c0_i32 = arith.constant 0 : i32
    %c0_i32_0 = arith.constant 0 : i32
    %c0_i32_1 = arith.constant 0 : i32
    return %arg0, %c0_i32, %c0_i32_0 : i32, i32, i32
  }
  func.func @transform_2(%arg0: i32, %arg1: i32) -> (i32, i32, i32) {
    %c0_i32 = arith.constant 0 : i32
    %c0_i32_0 = arith.constant 0 : i32
    %c0_i32_1 = arith.constant 0 : i32
    return %arg0, %c0_i32, %c0_i32_0 : i32, i32, i32
  }
}

</mosaic_0001>

<llo_original>
// kernel: tpu_custom_call.1
$region0: #{tpu_custom_call.1}
  #allocation0 [shape = 'u32[]', space=smem, size = 0x4, offset = 0x4, fixed_abs, tag = 'smem constant byte address 0x4 - core index']
  #allocation1 [shape = 'u32[144,128]{1,0:T(1,128)}', space=vmem, size = 0x12000, scoped, tag = 'internal scratch']
  %s0 = inlined_call_operand.hbm [shape: f32[2,4,128], index: 0, kind: input, shape index: {}]
  %s1 = inlined_call_operand.vmem [shape: f32[2,1,1], index: 1, kind: output, shape index: {0}]
  %s2 = inlined_call_operand.vmem [shape: f32[2,1,1], index: 2, kind: output, shape index: {1}]
  %3 = xla_tuple %s1, %s2
  %s4 = sld [smem:[#allocation0]]
  $region53: #{tpu_custom_call.1} parent=0
    _
  %s6 = ssub.s32 1, %s4
  %s7 = scalar_select 0, %s6, %s4
  $region1: #{tpu_custom_call.1} parent=0
    #allocation2 [shape = 'u8[4096]{0}', space=vmem, size = 0x1000, scoped, tag = 'input window, operand 0']
    #allocation3 [shape = 's32[2]{0}', space=sflag, size = 0x8, scoped, tag = 'scoped memory for tpu_custom_call.1']
    %8 = vsyncpa [#allocation3], 0
    %s9 = scalar_lea.sflag [#allocation3], 1
    %10 = vsyncpa %s9, 0
    loop: start=0, step=1, limit=4
    $region2: #{tpu_custom_call.1} parent=1 // loop_pre_header
      _
    $region3: #{tpu_custom_call.1} parent=1 // loop_header
      %s12 = sphi 0, %s16
      %p13 = scmp.ge.s32.totalorder %s12, 4
      %s19 = sphi 0, %s31
      %s20 = sphi 0, %s27
      %s21 = sphi 0, %s19
      %s22 = sphi 0, %s20
      %s23 = sphi 0, %s21
      %s24 = sphi 0, %s22
      %s36 = sphi 0, %s38
      %s39 = sphi 0, %s36
      %s40 = sphi 0, %s39
      %s56 = sphi 0, %s40
      %s62 = sphi 0, %s64
      %s65 = sphi 0, %s62
      %s66 = sphi 0, %s65
      %s82 = sphi 0, %s66
      %s88 = sphi 0, %s90
      %s91 = sphi 0, %s88
      %s92 = sphi 0, %s91
      %s108 = sphi 0, %s92
    $region4: #{tpu_custom_call.1} parent=1 // loop_header_branch
      %15 = sbr.rel (%p13) target = $region8
    $region5: #{tpu_custom_call.1} parent=1 // loop_body
      %s17 = ssub.s32 %s12, 1
      %s18 = ssub.s32 %s12, 2
      %s25 = sadd.s32 1, %s20
      %p26 = scmp.ge.s32.totalorder %s25, 1
      %s27 = scalar_select %p26, 0, %s25
      %s28 = sadd.s32 1, %s19
      %s29 = scalar_select %p26, %s28, %s19
      %p30 = scmp.ge.s32.totalorder %s29, 2
      %s31 = scalar_select %p30, 0, %s29
      %s32 = ssub.s32 %s19, %s31
      %s33 = ssub.s32 %s20, %s27
      %s34 = sor.u32 %s32, %s33
      %p35 = scmp.eq.s32.totalorder %s34, 0
      %s37 = sadd.s32 %s36, 1
      %s38 = scalar_select %p35, %s36, %s37
      %p41 = pneg %p35
      %p42 = scmp.eq.s32.totalorder %s12, 1
      %p43 = por %p41, %p42
      %p44 = scmp.ne.s32.totalorder %s36, %s39
      %p45 = scmp.eq.s32.totalorder %s12, 0
      %p46 = por %p44, %p45
      %p47 = scmp.ne.s32.totalorder %s36, %s39
      %p48 = scmp.eq.s32.totalorder %s17, 1
      %p49 = por %p47, %p48
      %p50 = scmp.ne.s32.totalorder %s39, %s40
      %p51 = scmp.eq.s32.totalorder %s17, 0
      %p52 = por %p50, %p51
      %p53 = scmp.ne.s32.totalorder %s39, %s40
      %p54 = scmp.eq.s32.totalorder %s18, 1
      %p55 = por %p53, %p54
      %p57 = scmp.ne.s32.totalorder %s40, %s56
      %p58 = scmp.eq.s32.totalorder %s18, 0
      %p59 = por %p57, %p58
      %s60 = ssub.s32 %s19, %s31
      %p61 = scmp.eq.s32.totalorder %s60, 0
      %s63 = sadd.s32 %s62, 1
      %s64 = scalar_select %p61, %s62, %s63
      %p67 = pneg %p61
      %p68 = scmp.eq.s32.totalorder %s12, 1
      %p69 = por %p67, %p68
      %p70 = scmp.ne.s32.totalorder %s62, %s65
      %p71 = scmp.eq.s32.totalorder %s12, 0
      %p72 = por %p70, %p71
      %p73 = scmp.ne.s32.totalorder %s62, %s65
      %p74 = scmp.eq.s32.totalorder %s17, 1
      %p75 = por %p73, %p74
      %p76 = scmp.ne.s32.totalorder %s65, %s66
      %p77 = scmp.eq.s32.totalorder %s17, 0
      %p78 = por %p76, %p77
      %p79 = scmp.ne.s32.totalorder %s65, %s66
      %p80 = scmp.eq.s32.totalorder %s18, 1
      %p81 = por %p79, %p80
      %p83 = scmp.ne.s32.totalorder %s66, %s82
      %p84 = scmp.eq.s32.totalorder %s18, 0
      %p85 = por %p83, %p84
      %s86 = ssub.s32 %s19, %s31
      %p87 = scmp.eq.s32.totalorder %s86, 0
      %s89 = sadd.s32 %s88, 1
      %s90 = scalar_select %p87, %s88, %s89
      %p93 = pneg %p87
      %p94 = scmp.eq.s32.totalorder %s12, 1
      %p95 = por %p93, %p94
      %p96 = scmp.ne.s32.totalorder %s88, %s91
      %p97 = scmp.eq.s32.totalorder %s12, 0
      %p98 = por %p96, %p97
      %p99 = scmp.ne.s32.totalorder %s88, %s91
      %p100 = scmp.eq.s32.totalorder %s17, 1
      %p101 = por %p99, %p100
      %p102 = scmp.ne.s32.totalorder %s91, %s92
      %p103 = scmp.eq.s32.totalorder %s17, 0
      %p104 = por %p102, %p103
      %p105 = scmp.ne.s32.totalorder %s91, %s92
      %p106 = scmp.eq.s32.totalorder %s18, 1
      %p107 = por %p105, %p106
      %p109 = scmp.ne.s32.totalorder %s92, %s108
      %p110 = scmp.eq.s32.totalorder %s18, 0
      %p111 = por %p109, %p110
      %p112 = scmp.le.s32.totalorder 1, %s12
      %p113 = scmp.lt.s32.totalorder %s12, 3
      %p114 = pnand %p112, %p113
      %p115 = pneg %p114
      // Predicated region
      $region9: #{tpu_custom_call.1} parent=5 // pred_check
        _
      $region10: #{tpu_custom_call.1} parent=5 // pred_check_branch
        %117 = sbr.rel (%p114) target = $region12
      $region11: #{tpu_custom_call.1} parent=5 // pred_region
        %s118 = ssub.s32 %s12, 1
      $region12: #{tpu_custom_call.1} parent=5 // pred_fallthru
        _
      %p119 = scmp.lt.s32.totalorder %s12, 2
      // Predicated region
      $region13: #{tpu_custom_call.1} parent=5 // pred_check
        %p120 = pneg %p119
      $region14: #{tpu_custom_call.1} parent=5 // pred_check_branch
        %122 = sbr.rel (%p120) target = $region16
      $region15: #{tpu_custom_call.1} parent=5 // pred_region
        // Predicated region
        $region17: #{tpu_custom_call.1} parent=15 // pred_check
          %p123 = pneg %p46
        $region18: #{tpu_custom_call.1} parent=15 // pred_check_branch
          %125 = sbr.rel (%p123) target = $region20
        $region19: #{tpu_custom_call.1} parent=15 // pred_region
          %s126 = sand.u32 %s36, 1
          %s127 = scalar_lea.sflag [#allocation3], %s126
          %s128 = sand.u32 %s36, 1
          %s129 = smul.addr %s128, 4
          %s130 = scalar_lea.vmem [#allocation2], %s129
          %s132 = ssub.s32 64, 64
          %133 = vsyncadd %s127, %s132
          %s134 = sadd.s32 %s20, %s19
          %s135 = smul.addr %s134, 64
          %s136 = scalar_lea.hbm %s0, %s135
          %s138 = sshll.u32 %s130, 4
          %s139 = int_to_ptr.vmem [resolvable:$true] %s138
          %141 = dma.hbm_to_vmem [thread:$0]  %s136, 64, %s139, %s127
        $region20: #{tpu_custom_call.1} parent=15 // pred_fallthru
          _
      $region16: #{tpu_custom_call.1} parent=5 // pred_fallthru
        _
      %p142 = scmp.le.s32.totalorder 1, %s12
      %p143 = scmp.lt.s32.totalorder %s12, 3
      %p144 = pnand %p142, %p143
      %p145 = pneg %p144
      // Predicated region
      $region21: #{tpu_custom_call.1} parent=5 // pred_check
        _
      $region22: #{tpu_custom_call.1} parent=5 // pred_check_branch
        %147 = sbr.rel (%p144) target = $region24
      $region23: #{tpu_custom_call.1} parent=5 // pred_region
        %s148 = ssub.s32 %s12, 1
        %s149 = sand.u32 %s39, 1
        %s150 = scalar_lea.sflag [#allocation3], %s149
        %s151 = sand.u32 %s39, 1
        %s152 = smul.addr %s151, 4
        %s153 = scalar_lea.vmem [#allocation2], %s152
        // Predicated region
        $region25: #{tpu_custom_call.1} parent=23 // pred_check
          %p154 = pneg %p52
        $region26: #{tpu_custom_call.1} parent=23 // pred_check_branch
          %156 = sbr.rel (%p154) target = $region28
        $region27: #{tpu_custom_call.1} parent=23 // pred_region
          %157 = dma.done %s150, 64
        $region28: #{tpu_custom_call.1} parent=23 // pred_fallthru
          _
        %s158 = sand.u32 %s39, 1
        %s159 = scalar_lea.sflag [#allocation3], %s158
        %s160 = sand.u32 %s39, 1
        %s161 = smul.addr %s160, 4
        %s162 = scalar_lea.vmem [#allocation2], %s161
        %p163 = pneg %p52
        %p164 = pneg %p49
        %p165 = pneg %p78
        %p166 = pneg %p75
        %p167 = scmp.lt.s32.totalorder %s21, 1
        %s168 = scalar_select %p167, %s21, 1
        %s169 = scalar_lea.vmem %s1, %s168
        %p170 = pneg %p104
        %p171 = pneg %p101
        %p172 = scmp.lt.s32.totalorder %s21, 1
        %s173 = scalar_select %p172, %s21, 1
        %s174 = scalar_lea.vmem %s2, %s173
        %p175 = scmp.lt.s32.totalorder %s21, 1
        %s176 = scalar_select %p175, %s21, 1
        %s177 = scalar_lea.vmem %s1, %s176
        %p178 = scmp.lt.s32.totalorder %s21, 1
        %s179 = scalar_select %p178, %s21, 1
        %s180 = scalar_lea.vmem %s2, %s179
        %p181 = scmp.eq.s32.totalorder %s22, 0
        // Predicated region
        $region29: #{tpu_custom_call.1} parent=23 // pred_check
          %p182 = pneg %p181
        $region30: #{tpu_custom_call.1} parent=23 // pred_check_branch
          %184 = sbr.rel (%p182) target = $region32
        $region31: #{tpu_custom_call.1} parent=23 // pred_region
          %vm185 = vcmask 0
          %186 = vst.msk [vmem:[%s177] sm:$0x1] %vm185, 0.0
          %187 = vst.msk [vmem:[%s180] sm:$0x1] %vm185, 0.0
        $region32: #{tpu_custom_call.1} parent=23 // pred_fallthru
          _
        %v188 = vld [vmem:[%s153] sm:$0xf]
        %v189 = vld [vmem:[%s177] sm:$0x1]
        %vm190 = vcmask 1043456
        %v191 = vsel %vm190, %v188, 0.0
        %192 = vadd.xlane.f32.xlu0 %v191
        %v193 = vpop.xlane.xlu0 %192
        %v194 = vrot.slane %v193, 4
        %v195 = vadd.f32 %v193, %v194
        %v196 = vrot.slane %v195, 2
        %v197 = vadd.f32 %v195, %v196
        %v198 = vrot.slane %v197, 1
        %v199 = vadd.f32 %v197, %v198
        %s200 = vtos %v199
        %v201 = vstv %s200
        %v202 = vadd.f32 %v189, %v201
        %vm203 = vcmask 0
        %204 = vst.msk [vmem:[%s177] sm:$0x1] %vm203, %v202
        %v205 = vld [vmem:[%s180] sm:$0x1]
        %v206 = vmul.f32 %v188, %v188
        %v207 = vsel %vm190, %v206, 0.0
        %208 = vadd.xlane.f32.xlu0 %v207
        %v209 = vpop.xlane.xlu0 %208
        %v210 = vrot.slane %v209, 4
        %v211 = vadd.f32 %v209, %v210
        %v212 = vrot.slane %v211, 2
        %v213 = vadd.f32 %v211, %v212
        %v214 = vrot.slane %v213, 1
        %v215 = vadd.f32 %v213, %v214
        %s216 = vtos %v215
        %v217 = vstv %s216
        %v218 = vadd.f32 %v205, %v217
        %219 = vst.msk [vmem:[%s180] sm:$0x1] %vm203, %v218
        %p220 = scmp.lt.s32.totalorder %s21, 1
        %s221 = scalar_select %p220, %s21, 1
        %s222 = scalar_lea.vmem %s1, %s221
        %p223 = scmp.lt.s32.totalorder %s21, 1
        %s224 = scalar_select %p223, %s21, 1
        %s225 = scalar_lea.vmem %s2, %s224
        // Predicated region
        $region33: #{tpu_custom_call.1} parent=23 // pred_check
          %p226 = pneg %p75
        $region34: #{tpu_custom_call.1} parent=23 // pred_check_branch
          %228 = sbr.rel (%p226) target = $region36
        $region35: #{tpu_custom_call.1} parent=23 // pred_region
          _
        $region36: #{tpu_custom_call.1} parent=23 // pred_fallthru
          _
        // Predicated region
        $region37: #{tpu_custom_call.1} parent=23 // pred_check
          %p229 = pneg %p101
        $region38: #{tpu_custom_call.1} parent=23 // pred_check_branch
          %231 = sbr.rel (%p229) target = $region40
        $region39: #{tpu_custom_call.1} parent=23 // pred_region
          _
        $region40: #{tpu_custom_call.1} parent=23 // pred_fallthru
          _
      $region24: #{tpu_custom_call.1} parent=5 // pred_fallthru
        _
      %p232 = scmp.le.s32.totalorder 2, %s12
      // Predicated region
      $region41: #{tpu_custom_call.1} parent=5 // pred_check
        %p233 = pneg %p232
      $region42: #{tpu_custom_call.1} parent=5 // pred_check_branch
        %235 = sbr.rel (%p233) target = $region44
      $region43: #{tpu_custom_call.1} parent=5 // pred_region
        %s236 = ssub.s32 %s12, 2
        // Predicated region
        $region45: #{tpu_custom_call.1} parent=43 // pred_check
          %p237 = pneg %p81
        $region46: #{tpu_custom_call.1} parent=43 // pred_check_branch
          %239 = sbr.rel (%p237) target = $region48
        $region47: #{tpu_custom_call.1} parent=43 // pred_region
          %p240 = scmp.lt.s32.totalorder %s23, 1
          %s241 = scalar_select %p240, %s23, 1
          %s242 = scalar_lea.vmem %s1, %s241
        $region48: #{tpu_custom_call.1} parent=43 // pred_fallthru
          _
        // Predicated region
        $region49: #{tpu_custom_call.1} parent=43 // pred_check
          %p243 = pneg %p107
        $region50: #{tpu_custom_call.1} parent=43 // pred_check_branch
          %245 = sbr.rel (%p243) target = $region52
        $region51: #{tpu_custom_call.1} parent=43 // pred_region
          %p246 = scmp.lt.s32.totalorder %s23, 1
          %s247 = scalar_select %p246, %s23, 1
          %s248 = scalar_lea.vmem %s2, %s247
        $region52: #{tpu_custom_call.1} parent=43 // pred_fallthru
          _
      $region44: #{tpu_custom_call.1} parent=5 // pred_fallthru
        _
    $region6: #{tpu_custom_call.1} parent=1 // loop_footer
      %s16 = sadd.s32 1, %s12
    $region7: #{tpu_custom_call.1} parent=1 // loop_footer_branch
      %11 = sbr.rel target = $region3
    $region8: #{tpu_custom_call.1} parent=1 // loop_exit
      _
    %249 = vsyncpa [#allocation3], 1
    %s250 = scalar_lea.sflag [#allocation3], 1
    %251 = vsyncpa %s250, 1

</llo_original>
